<compile_context>
chip_gen: v6e
topology: v6e:2x2x1
jax: 0.10.0
libtpu: 0.0.40
codegen_flags: <defaults>
</compile_context>

<pallas_src>
import math
from functools import partial

import jax
import jax.numpy as jnp
import numpy as np
from jax.experimental import pallas as pl
from jax.experimental.pallas import tpu as pltpu


# -----------------------------------------------------------------------------
# Primary kernel: compute the sinusoidal embedding in-kernel (no table input).
# -----------------------------------------------------------------------------
def _sinusoid_compute_kernel(t_ref, out_ref):
    """out[i, c] = sin(t[i] * f(c)) if c even else cos(t[i] * f(c)),
    with f(c) = exp(-(ln 1e4 / E) * (c - c % 2))  (PyTorch interleaved layout).

    t_ref:   SMEM (B,) int32 timesteps
    out_ref: VMEM (B, E) float32
    """
    b, e = out_ref.shape
    col = jax.lax.broadcasted_iota(jnp.int32, (b, e), dimension=1)   # lane index
    row = jax.lax.broadcasted_iota(jnp.int32, (b, e), dimension=0)   # sublane index
    parity = jnp.bitwise_and(col, 1)                                 # 0 = sin, 1 = cos lane
    freq_exp = (col - parity).astype(jnp.float32)                    # 2 * (c // 2)
    inv_freq = jnp.exp(freq_exp * (-(math.log(10000.0) / e)))        # EUP exp

    # Broadcast the B SMEM scalars into a (B, E) timestep matrix.  B is tiny
    # and static, so this is a short fully-unrolled chain of vector selects.
    t_mat = jnp.zeros((b, e), dtype=jnp.float32)
    for i in range(b):
        t_mat = jnp.where(row == i, t_ref[i].astype(jnp.float32), t_mat)

    angle = t_mat * inv_freq
    # Single coalesced, lane-dense (B, E) store (no per-row masked vst chain).
    out_ref[...] = jnp.where(parity == 0, jnp.sin(angle), jnp.cos(angle))


@partial(jax.jit, static_argnames=("embed_dim",))
def sinusoidal_embeddings_forward(x, t, *, embed_dim):
    """Pallas equivalent of SinusoidalEmbeddings.forward(x, t) -> (B, E, 1, 1)."""
    del x  # PyTorch only uses x for .device; placement is implicit in JAX.
    assert embed_dim % 2 == 0, "embed_dim must be even (matches the PyTorch module)"
    b = t.shape[0]
    emb = pl.pallas_call(
        _sinusoid_compute_kernel,
        out_shape=jax.ShapeDtypeStruct((b, embed_dim), jnp.float32),
        in_specs=[pl.BlockSpec(memory_space=pltpu.MemorySpace.SMEM)],   # t only
        out_specs=pl.BlockSpec(memory_space=pltpu.MemorySpace.VMEM),
        cost_estimate=pl.CostEstimate(
            flops=6 * b * embed_dim,
            transcendentals=2 * b * embed_dim,       # exp + sin/cos per element
            bytes_accessed=b * 4 + b * embed_dim * 4,
        ),
    )(t.astype(jnp.int32))
    return emb[:, :, None, None]


# -----------------------------------------------------------------------------
# Fallback: whole-table-in-VMEM gather (only if sin/cos lowering is missing).
# Applies the review's "if you keep the table" items: one coalesced (B, E)
# store and an in-kernel scalar clamp instead of a wrapper-side jnp.clip.
# -----------------------------------------------------------------------------
def make_sinusoidal_table(time_steps: int, embed_dim: int) -> jnp.ndarray:
    """Deterministic buffer init, mirroring the PyTorch __init__ (float32)."""
    assert embed_dim % 2 == 0
    position = jnp.arange(time_steps, dtype=jnp.float32)[:, None]
    div = jnp.exp(jnp.arange(0, embed_dim, 2, dtype=jnp.float32)
                  * -(math.log(10000.0) / embed_dim))
    table = jnp.zeros((time_steps, embed_dim), dtype=jnp.float32)
    table = table.at[:, 0::2].set(jnp.sin(position * div))
    table = table.at[:, 1::2].set(jnp.cos(position * div))
    return table


def _table_gather_kernel(t_ref, table_ref, out_ref):
    """out[i, :] = table[clamp(t[i]), :], written back as one (B, E) store."""
    b = out_ref.shape[0]
    time_steps = table_ref.shape[0]
    rows = []
    for i in range(b):
        idx = jnp.clip(t_ref[i], 0, time_steps - 1)   # scalar-ALU clamp, co-issues free
        rows.append(table_ref[pl.ds(idx, 1), :])      # (1, E) dynamic row load
    out_ref[...] = jnp.concatenate(rows, axis=0)      # ONE store, not B masked stores


@jax.jit
def sinusoidal_embeddings_forward_table(x, t, table):
    del x
    b = t.shape[0]
    time_steps, embed_dim = table.shape
    # v7x gate (moot at 32 KB): whole-table residency assumes 2*table_bytes fits
    # the ~32 MiB scoped VMEM budget; for huge tables switch to a per-row
    # pl.Element gather with grid=(B,) and scalar-prefetched t.
    emb = pl.pallas_call(
        _table_gather_kernel,
        out_shape=jax.ShapeDtypeStruct((b, embed_dim), table.dtype),
        in_specs=[
            pl.BlockSpec(memory_space=pltpu.MemorySpace.SMEM),   # t (scalars)
            pl.BlockSpec(memory_space=pltpu.MemorySpace.VMEM),   # whole table
        ],
        out_specs=pl.BlockSpec(memory_space=pltpu.MemorySpace.VMEM),
        cost_estimate=pl.CostEstimate(
            flops=0,
            transcendentals=0,
            bytes_accessed=time_steps * embed_dim * 4 + b * embed_dim * 4 + b * 4,
        ),
    )(t.astype(jnp.int32), table)
    return emb[:, :, None, None]


if __name__ == "__main__":
    TIME_STEPS = 64
    EMBED_DIM = 128
    BATCH = 4

    key = jax.random.PRNGKey(0)
    kx, kt = jax.random.split(key)

    # x follows PyTorch NCHW convention; it is not used in the computation.
    x = jax.random.normal(kx, (BATCH, 3, 16, 16), dtype=jnp.float32)
    t = jax.random.randint(kt, (BATCH,), 0, TIME_STEPS, dtype=jnp.int32)

    # float64 numpy reference (mirrors the PyTorch __init__ + forward).
    pos = np.arange(TIME_STEPS, dtype=np.float64)[:, None]
    div = np.exp(np.arange(0, EMBED_DIM, 2, dtype=np.float64)
                 * -(math.log(10000.0) / EMBED_DIM))
    ref_table = np.zeros((TIME_STEPS, EMBED_DIM), dtype=np.float64)
    ref_table[:, 0::2] = np.sin(pos * div)
    ref_table[:, 1::2] = np.cos(pos * div)
    ref = ref_table[np.asarray(t)][:, :, None, None]

    def run_compute():
        return sinusoidal_embeddings_forward(x, t, embed_dim=EMBED_DIM)

    def run_table():
        table = make_sinusoidal_table(TIME_STEPS, EMBED_DIM)
        return sinusoidal_embeddings_forward_table(x, t, table)

    last_err = None
    for run in (run_compute, run_table):   # primary first; table gather as safety net
        try:
            out = jax.block_until_ready(run())
            assert out.shape == (BATCH, EMBED_DIM, 1, 1), out.shape
            assert out.dtype == jnp.float32, out.dtype
            np.testing.assert_allclose(
                np.asarray(out, dtype=np.float64), ref, rtol=0.0, atol=1e-4)
            print("KERNEL_OK")
            break
        except Exception as e:  # lowering not available / tolerance miss -> fallback
            last_err = e
    else:
        raise last_err
</pallas_src>

<mosaic_0001>
module attributes {stable_mosaic.version = 11 : i64} {
  func.func @_sinusoid_compute_kernel(%arg0: memref<4xi32, #tpu.memory_space<smem>>, %arg1: memref<4x128xf32, #tpu.memory_space<vmem>>) attributes {dimension_semantics = [], scalar_prefetch = 0 : i64, scratch_operands = 0 : i64, tpu.core_type = #tpu.core_type<tc>} {
    %0 = tpu.iota {dimensions = array<i32: 1>} : vector<4x128xi32>
    %1 = tpu.iota {dimensions = array<i32: 0>} : vector<4x128xi32>
    %c1_i32 = arith.constant 1 : i32
    %2 = vector.broadcast %c1_i32 : i32 to vector<4x128xi32>
    %3 = arith.andi %0, %2 : vector<4x128xi32>
    %4 = arith.subi %0, %3 : vector<4x128xi32>
    %5 = arith.sitofp %4 : vector<4x128xi32> to vector<4x128xf32>
    %cst = arith.constant -0.0719557852 : f32
    %6 = vector.broadcast %cst : f32 to vector<4x128xf32>
    %7 = arith.mulf %5, %6 : vector<4x128xf32>
    %8 = math.exp %7 : vector<4x128xf32>
    %cst_0 = arith.constant 0.000000e+00 : f32
    %9 = vector.broadcast %cst_0 : f32 to vector<4x128xf32>
    %c0_i32 = arith.constant 0 : i32
    %10 = vector.broadcast %c0_i32 : i32 to vector<4x128xi32>
    %11 = arith.cmpi eq, %1, %10 : vector<4x128xi32>
    %c0 = arith.constant 0 : index
    %12 = memref.load %arg0[%c0] : memref<4xi32, #tpu.memory_space<smem>>
    %13 = arith.sitofp %12 : i32 to f32
    %14 = vector.broadcast %13 : f32 to vector<4x128xf32>
    %15 = arith.select %11, %14, %9 : vector<4x128xi1>, vector<4x128xf32>
    %c1_i32_1 = arith.constant 1 : i32
    %16 = vector.broadcast %c1_i32_1 : i32 to vector<4x128xi32>
    %17 = arith.cmpi eq, %1, %16 : vector<4x128xi32>
    %c1 = arith.constant 1 : index
    %18 = memref.load %arg0[%c1] : memref<4xi32, #tpu.memory_space<smem>>
    %19 = arith.sitofp %18 : i32 to f32
    %20 = vector.broadcast %19 : f32 to vector<4x128xf32>
    %21 = arith.select %17, %20, %15 : vector<4x128xi1>, vector<4x128xf32>
    %c2_i32 = arith.constant 2 : i32
    %22 = vector.broadcast %c2_i32 : i32 to vector<4x128xi32>
    %23 = arith.cmpi eq, %1, %22 : vector<4x128xi32>
    %c2 = arith.constant 2 : index
    %24 = memref.load %arg0[%c2] : memref<4xi32, #tpu.memory_space<smem>>
    %25 = arith.sitofp %24 : i32 to f32
    %26 = vector.broadcast %25 : f32 to vector<4x128xf32>
    %27 = arith.select %23, %26, %21 : vector<4x128xi1>, vector<4x128xf32>
    %c3_i32 = arith.constant 3 : i32
    %28 = vector.broadcast %c3_i32 : i32 to vector<4x128xi32>
    %29 = arith.cmpi eq, %1, %28 : vector<4x128xi32>
    %c3 = arith.constant 3 : index
    %30 = memref.load %arg0[%c3] : memref<4xi32, #tpu.memory_space<smem>>
    %31 = arith.sitofp %30 : i32 to f32
    %32 = vector.broadcast %31 : f32 to vector<4x128xf32>
    %33 = arith.select %29, %32, %27 : vector<4x128xi1>, vector<4x128xf32>
    %34 = arith.mulf %33, %8 : vector<4x128xf32>
    %c0_i32_2 = arith.constant 0 : i32
    %35 = vector.broadcast %c0_i32_2 : i32 to vector<4x128xi32>
    %36 = arith.cmpi eq, %3, %35 : vector<4x128xi32>
    %37 = math.sin %34 : vector<4x128xf32>
    %38 = math.cos %34 : vector<4x128xf32>
    %39 = arith.select %36, %37, %38 : vector<4x128xi1>, vector<4x128xf32>
    %c0_3 = arith.constant 0 : index
    %c0_4 = arith.constant 0 : index
    %40 = vector.load %arg1[%c0_3, %c0_4] : memref<4x128xf32, #tpu.memory_space<vmem>>, vector<4x128xf32>
    tpu.vector_store %arg1[%c0_3, %c0_4], %39 {strides = array<i32>} : memref<4x128xf32, #tpu.memory_space<vmem>>, vector<4x128xf32>,
    return
  }
}

module attributes {stable_mosaic.version = 11 : i64} {
  func.func @_table_gather_kernel(%arg0: memref<4xi32, #tpu.memory_space<smem>>, %arg1: memref<64x128xf32, #tpu.memory_space<vmem>>, %arg2: memref<4x128xf32, #tpu.memory_space<vmem>>) attributes {dimension_semantics = [], scalar_prefetch = 0 : i64, scratch_operands = 0 : i64, tpu.core_type = #tpu.core_type<tc>} {
    %c0 = arith.constant 0 : index
    %0 = memref.load %arg0[%c0] : memref<4xi32, #tpu.memory_space<smem>>
    %c0_i32 = arith.constant 0 : i32
    %c63_i32 = arith.constant 63 : i32
    %1 = arith.maxsi %c0_i32, %0 : i32
    %2 = arith.minsi %c63_i32, %1 : i32
    %3 = arith.index_cast %2 : i32 to index
    %c0_0 = arith.constant 0 : index
    %4 = vector.load %arg1[%3, %c0_0] : memref<64x128xf32, #tpu.memory_space<vmem>>, vector<1x128xf32>
    %c1 = arith.constant 1 : index
    %5 = memref.load %arg0[%c1] : memref<4xi32, #tpu.memory_space<smem>>
    %c0_i32_1 = arith.constant 0 : i32
    %c63_i32_2 = arith.constant 63 : i32
    %6 = arith.maxsi %c0_i32_1, %5 : i32
    %7 = arith.minsi %c63_i32_2, %6 : i32
    %8 = arith.index_cast %7 : i32 to index
    %c0_3 = arith.constant 0 : index
    %9 = vector.load %arg1[%8, %c0_3] : memref<64x128xf32, #tpu.memory_space<vmem>>, vector<1x128xf32>
    %c2 = arith.constant 2 : index
    %10 = memref.load %arg0[%c2] : memref<4xi32, #tpu.memory_space<smem>>
    %c0_i32_4 = arith.constant 0 : i32
    %c63_i32_5 = arith.constant 63 : i32
    %11 = arith.maxsi %c0_i32_4, %10 : i32
    %12 = arith.minsi %c63_i32_5, %11 : i32
    %13 = arith.index_cast %12 : i32 to index
    %c0_6 = arith.constant 0 : index
    %14 = vector.load %arg1[%13, %c0_6] : memref<64x128xf32, #tpu.memory_space<vmem>>, vector<1x128xf32>
    %c3 = arith.constant 3 : index
    %15 = memref.load %arg0[%c3] : memref<4xi32, #tpu.memory_space<smem>>
    %c0_i32_7 = arith.constant 0 : i32
    %c63_i32_8 = arith.constant 63 : i32
    %16 = arith.maxsi %c0_i32_7, %15 : i32
    %17 = arith.minsi %c63_i32_8, %16 : i32
    %18 = arith.index_cast %17 : i32 to index
    %c0_9 = arith.constant 0 : index
    %19 = vector.load %arg1[%18, %c0_9] : memref<64x128xf32, #tpu.memory_space<vmem>>, vector<1x128xf32>
    %20 = tpu.concatenate %4, %9, %14, %19 in 0 : vector<1x128xf32>, vector<1x128xf32>, vector<1x128xf32>, vector<1x128xf32> -> vector<4x128xf32>
    %c0_10 = arith.constant 0 : index
    %c0_11 = arith.constant 0 : index
    %21 = vector.load %arg2[%c0_10, %c0_11] : memref<4x128xf32, #tpu.memory_space<vmem>>, vector<4x128xf32>
    tpu.vector_store %arg2[%c0_10, %c0_11], %20 {strides = array<i32>} : memref<4x128xf32, #tpu.memory_space<vmem>>, vector<4x128xf32>,
    return
  }
}

</mosaic_0001>

<llo_original>
// kernel: sinusoidal_embeddings_forward.1
$region0: #{sinusoidal_embeddings_forward.1}
  #allocation0 [shape = 'u32[]', space=smem, size = 0x4, offset = 0x4, fixed_abs, tag = 'smem constant byte address 0x4 - core index']
  #allocation1 [shape = 'u32[144,128]{1,0:T(1,128)}', space=vmem, size = 0x12000, scoped, tag = 'internal scratch']
  %s0 = inlined_call_operand.hbm [shape: s32[4], index: 0, kind: input, shape index: {}]
  %s1 = inlined_call_operand.hbm [shape: f32[4,128], index: 1, kind: output, shape index: {}]
  %s2 = sld [smem:[#allocation0]]
  $region18: #{sinusoidal_embeddings_forward.1} parent=0
    _
  %s4 = ssub.s32 1, %s2
  %s5 = scalar_select 0, %s4, %s2
  $region1: #{sinusoidal_embeddings_forward.1} parent=0
    #allocation2 [shape = 'u8[512]{0}', space=smem, size = 0x200, scoped, tag = 'input window, operand 0, single buffered']
    #allocation3 [shape = 's32[1]{0}', space=sflag, size = 0x4, scoped, tag = 'scoped memory for sinusoidal_embeddings_forward.1']
    #allocation4 [shape = 's32[1]{0}', space=sflag, size = 0x4, scoped, tag = 'scoped memory for sinusoidal_embeddings_forward.1']
    #allocation5 [shape = 'u8[2048]{0}', space=vmem, size = 0x800, scoped, tag = 'output window, operand 0, single buffered']
    %6 = vsyncpa [#allocation4], 0
    %7 = vsyncpa [#allocation3], 0
    // Predicated region
    $region2: #{sinusoidal_embeddings_forward.1} parent=1 // pred_check
      _
    $region3: #{sinusoidal_embeddings_forward.1} parent=1 // pred_check_branch
      %9 = sbr.rel (0) target = $region5
    $region4: #{sinusoidal_embeddings_forward.1} parent=1 // pred_region
      %s11 = ssub.s32 16, 16
      %12 = vsyncadd [#allocation4], %s11
      %15 = dma.hbm_to_smem %s0, 16, [#allocation2], [#allocation4]
    $region5: #{sinusoidal_embeddings_forward.1} parent=1 // pred_fallthru
      _
    // Predicated region
    $region6: #{sinusoidal_embeddings_forward.1} parent=1 // pred_check
      _
    $region7: #{sinusoidal_embeddings_forward.1} parent=1 // pred_check_branch
      %17 = sbr.rel (0) target = $region9
    $region8: #{sinusoidal_embeddings_forward.1} parent=1 // pred_region
      %18 = dma.done [#allocation4], 16
    $region9: #{sinusoidal_embeddings_forward.1} parent=1 // pred_fallthru
      _
    %19 = sfence
    %v20 = vlaneseq
    %v21 = vand.u32 %v20, 127
    %v22 = vlaneseq
    %v23 = vshrl.u32 %v22, 7
    %v24 = vand.u32 %v21, 1
    %v25 = vsub.s32 %v21, %v24
    %v26 = vcvt.s32.f32 %v25
    %v27 = vmul.f32 %v26, -0.071955785
    %v28 = vmul.f32 %v27, 1.442695
    %v29 = vpow.pop %v28
    %vm30 = vcmp.eq.s32.totalorder %v23, 0
    %s31 = sld [smem:[#allocation2]]
    %s32 = scvt.s32.f32 %s31
    %v33 = vstv %s32
    %v34 = vsel %vm30, %v33, 0.0
    %vm35 = vcmp.eq.s32.totalorder %v23, 1
    %s36 = sld [smem:[#allocation2 + $0x1]]
    %s37 = scvt.s32.f32 %s36
    %v38 = vstv %s37
    %v39 = vsel %vm35, %v38, %v34
    %vm40 = vcmp.eq.s32.totalorder %v23, 2
    %s41 = sld [smem:[#allocation2 + $0x2]]
    %s42 = scvt.s32.f32 %s41
    %v43 = vstv %s42
    %v44 = vsel %vm40, %v43, %v39
    %vm45 = vcmp.eq.s32.totalorder %v23, 3
    %s46 = sld [smem:[#allocation2 + $0x3]]
    %s47 = scvt.s32.f32 %s46
    %v48 = vstv %s47
    %v49 = vsel %vm45, %v48, %v44
    %v50 = vmul.f32 %v49, %v29
    %vm51 = vcmp.eq.s32.totalorder %v24, 0
    %v52 = vand.u32 2147483647, %v50
    %vm53 = vcmp.le.f32.partialorder %v52, 0.7853982
    %vm54 = vcmp.lt.s32.totalorder %v50, 0
    %v55 = vand.u32 %v50, 2139095040
    %v56 = vshrl.u32 %v55, 23
    %v57 = vsub.s32 %v56, 127
    %v58 = vand.u32 2147483647, %v50
    %v59 = vand.u32 %v58, 8388607
    %v60 = vor.u32 %v59, 8388608
    %v61 = vsub.s32 0, %v60
    %v62 = vadd.s32 %v57, 1
    %vm63 = vcmp.gt.s32.totalorder %v62, 0
    %v64 = vsel %vm63, %v62, 0
    %v65 = vshrl.u32 %v64, 5
    %v66 = vand.u32 %v64, 31
    %v67 = vsub.s32 32, %v66
    %v68 = vshrl.u32 683565275, %v67
    %v69 = vshll.u32 683565275, %v66
    %v70 = vshrl.u32 2475754826, %v67
    %v71 = vor.u32 %v69, %v70
    %v72 = vshll.u32 2475754826, %v66
    %v73 = vshrl.u32 2131351028, %v67
    %v74 = vor.u32 %v72, %v73
    %v75 = vshll.u32 2131351028, %v66
    %v76 = vshrl.u32 2102212464, %v67
    %v77 = vor.u32 %v75, %v76
    %v78 = vshll.u32 2102212464, %v66
    %v79 = vshrl.u32 920167782, %v67
    %v80 = vor.u32 %v78, %v79
    %v81 = vshll.u32 920167782, %v66
    %v82 = vshrl.u32 1326507024, %v67
    %v83 = vor.u32 %v81, %v82
    %vm84 = vcmp.lt.s32.totalorder %v65, 1
    %vm85 = vcmp.lt.s32.totalorder %v65, 2
    %vm86 = vcmp.lt.s32.totalorder %v65, 3
    %vm87 = vcmp.lt.s32.totalorder %v65, 4
    %v88 = vsel %vm84, %v68, %v71
    %v89 = vsel %vm87, %v77, 2102212464
    %v90 = vsel %vm86, %v74, %v89
    %v91 = vsel %vm85, %v88, %v90
    %v92 = vsel %vm84, %v71, %v74
    %v93 = vsel %vm87, %v80, 920167782
    %v94 = vsel %vm86, %v77, %v93
    %v95 = vsel %vm85, %v92, %v94
    %v96 = vsel %vm84, %v74, %v77
    %v97 = vsel %vm87, %v83, 1326507024
    %v98 = vsel %vm86, %v80, %v97
    %v99 = vsel %vm85, %v96, %v98
    %v100 = vshll.u32 %v60, 8
    %v101 = vmul.u32.u64.compose %v100, %v99
    %v102 = vextract.low.u32 %v101
    %v103 = vextract.high.u32 %v101
    %v104 = vmul.u32.u64.compose %v100, %v95
    %v105 = vextract.low.u32 %v104
    %v106 = vextract.high.u32 %v104
    %v107 = vmul.u32 %v100, %v91
    %v108 = vadd.s32 %v103, %v105
    %vm109 = vc.u32 %v103, %v105
    %v110 = vadd.s32 %v106, 1
    %v111 = vsel %vm109, %v110, %v106
    %v112 = vadd.s32 %v107, %v111
    %v113 = vadd.s32 %v112, 536870912
    %v114 = vshrl.u32 %v113, 30
    %v115 = vshll.u32 %v114, 30
    %v116 = vsub.s32 %v112, %v115
    %vm117 = vcmp.lt.s32.totalorder %v116, 0
    %v118 = vsub.s32 0, %v116
    %v119 = vsel %vm117, %v118, %v116
    %v120 = vclz %v119
    %v121 = vsub.s32 %v120, 2
    %vm122 = vcmp.gt.s32.totalorder 0, %v121
    %v123 = vsel %vm122, 0, %v121
    %v124 = vsub.s32 32, %v123
    %v125 = vshll.u32 %v116, %v123
    %v126 = vshrl.u32 %v108, %v124
    %v127 = vor.u32 %v125, %v126
    %v128 = vsub.s32 4294967266, %v123
    %v129 = vadd.s32 %v128, 127
    %v130 = vshll.u32 %v129, 23
    %v131 = vor.u32 4788187, %v130
    %v132 = vand.u32 2147483647, %v131
    %v134 = vcvt.s32.f32 %v127
    %v135 = vmul.f32 %v134, %v132
    %v136 = vxor.u32 %v135, 2147483648
    %v137 = vsel %vm54, %v136, %v135
    %v138 = vsub.s32 4, %v114
    %v139 = vsel %vm54, %v138, %v114
    %v140 = vsel %vm53, %v50, %v137
    %v141 = vsel %vm53, 0, %v139
    %v142 = vcosq.f32.pop %v140
    %v143 = vsinq.f32.pop %v140
    %vm144 = vweird.f32 %v50
    %v145 = vadd.s32 %v141, 3
    %v146 = vand.u32 %v145, 3
    %vm147 = vcmp.lt.s32.totalorder %v146, 2
    %vm148 = vcmp.eq.s32.totalorder %v146, 0
    %v149 = vxor.u32 %v143, 2147483648
    %v150 = vsel %vm148, %v142, %v149
    %vm151 = vcmp.eq.s32.totalorder %v146, 2
    %v152 = vxor.u32 %v142, 2147483648
    %v153 = vsel %vm151, %v152, %v143
    %v154 = vsel %vm147, %v150, %v153
    %v155 = vsel %vm144, nan, %v154
    %v156 = vand.u32 2147483647, %v50
    %vm157 = vcmp.le.f32.partialorder %v156, 0.7853982
    %vm158 = vcmp.lt.s32.totalorder %v50, 0
    %v159 = vand.u32 %v50, 2139095040
    %v160 = vshrl.u32 %v159, 23
    %v161 = vsub.s32 %v160, 127
    %v162 = vand.u32 2147483647, %v50
    %v163 = vand.u32 %v162, 8388607
    %v164 = vor.u32 %v163, 8388608
    %v165 = vsub.s32 0, %v164
    %v166 = vadd.s32 %v161, 1
    %vm167 = vcmp.gt.s32.totalorder %v166, 0
    %v168 = vsel %vm167, %v166, 0
    %v169 = vshrl.u32 %v168, 5
    %v170 = vand.u32 %v168, 31
    %v171 = vsub.s32 32, %v170
    %v172 = vshrl.u32 683565275, %v171
    %v173 = vshll.u32 683565275, %v170
    %v174 = vshrl.u32 2475754826, %v171
    %v175 = vor.u32 %v173, %v174
    %v176 = vshll.u32 2475754826, %v170
    %v177 = vshrl.u32 2131351028, %v171
    %v178 = vor.u32 %v176, %v177
    %v179 = vshll.u32 2131351028, %v170
    %v180 = vshrl.u32 2102212464, %v171
    %v181 = vor.u32 %v179, %v180
    %v182 = vshll.u32 2102212464, %v170
    %v183 = vshrl.u32 920167782, %v171
    %v184 = vor.u32 %v182, %v183
    %v185 = vshll.u32 920167782, %v170
    %v186 = vshrl.u32 1326507024, %v171
    %v187 = vor.u32 %v185, %v186
    %vm188 = vcmp.lt.s32.totalorder %v169, 1
    %vm189 = vcmp.lt.s32.totalorder %v169, 2
    %vm190 = vcmp.lt.s32.totalorder %v169, 3
    %vm191 = vcmp.lt.s32.totalorder %v169, 4
    %v192 = vsel %vm188, %v172, %v175
    %v193 = vsel %vm191, %v181, 2102212464
    %v194 = vsel %vm190, %v178, %v193
    %v195 = vsel %vm189, %v192, %v194
    %v196 = vsel %vm188, %v175, %v178
    %v197 = vsel %vm191, %v184, 920167782
    %v198 = vsel %vm190, %v181, %v197
    %v199 = vsel %vm189, %v196, %v198
    %v200 = vsel %vm188, %v178, %v181
    %v201 = vsel %vm191, %v187, 1326507024
    %v202 = vsel %vm190, %v184, %v201
    %v203 = vsel %vm189, %v200, %v202
    %v204 = vshll.u32 %v164, 8
    %v205 = vmul.u32.u64.compose %v204, %v203
    %v206 = vextract.low.u32 %v205
    %v207 = vextract.high.u32 %v205
    %v208 = vmul.u32.u64.compose %v204, %v199
    %v209 = vextract.low.u32 %v208
    %v210 = vextract.high.u32 %v208
    %v211 = vmul.u32 %v204, %v195
    %v212 = vadd.s32 %v207, %v209
    %vm213 = vc.u32 %v207, %v209
    %v214 = vadd.s32 %v210, 1
    %v215 = vsel %vm213, %v214, %v210
    %v216 = vadd.s32 %v211, %v215
    %v217 = vadd.s32 %v216, 536870912
    %v218 = vshrl.u32 %v217, 30
    %v219 = vshll.u32 %v218, 30
    %v220 = vsub.s32 %v216, %v219
    %vm221 = vcmp.lt.s32.totalorder %v220, 0
    %v222 = vsub.s32 0, %v220
    %v223 = vsel %vm221, %v222, %v220
    %v224 = vclz %v223
    %v225 = vsub.s32 %v224, 2
    %vm226 = vcmp.gt.s32.totalorder 0, %v225
    %v227 = vsel %vm226, 0, %v225
    %v228 = vsub.s32 32, %v227
    %v229 = vshll.u32 %v220, %v227
    %v230 = vshrl.u32 %v212, %v228
    %v231 = vor.u32 %v229, %v230
    %v232 = vsub.s32 4294967266, %v227
    %v233 = vadd.s32 %v232, 127
    %v234 = vshll.u32 %v233, 23
    %v235 = vor.u32 4788187, %v234
    %v236 = vand.u32 2147483647, %v235
    %v238 = vcvt.s32.f32 %v231
    %v239 = vmul.f32 %v238, %v236
    %v240 = vxor.u32 %v239, 2147483648
    %v241 = vsel %vm158, %v240, %v239
    %v242 = vsub.s32 4, %v218
    %v243 = vsel %vm158, %v242, %v218
    %v244 = vsel %vm157, %v50, %v241
    %v245 = vsel %vm157, 0, %v243
    %v246 = vcosq.f32.pop %v244
    %v247 = vsinq.f32.pop %v244
    %vm248 = vweird.f32 %v50
    %v249 = vand.u32 %v245, 3
    %vm250 = vcmp.lt.s32.totalorder %v249, 2
    %vm251 = vcmp.eq.s32.totalorder %v249, 0
    %v252 = vxor.u32 %v247, 2147483648
    %v253 = vsel %vm251, %v246, %v252
    %vm254 = vcmp.eq.s32.totalorder %v249, 2
    %v255 = vxor.u32 %v246, 2147483648
    %v256 = vsel %vm254, %v255, %v247
    %v257 = vsel %vm250, %v253, %v256
    %v258 = vsel %vm248, nan, %v257
    %v259 = vsel %vm51, %v155, %v258
    %260 = vst [vmem:[#allocation5] sm:$0xf] %v259
    // Predicated region
    $region10: #{sinusoidal_embeddings_forward.1} parent=1 // pred_check
      _
    $region11: #{sinusoidal_embeddings_forward.1} parent=1 // pred_check_branch
      %262 = sbr.rel (0) target = $region13
    $region12: #{sinusoidal_embeddings_forward.1} parent=1 // pred_region
      %s264 = ssub.s32 64, 64
      %265 = vsyncadd [#allocation3], %s264
      %s267 = sshll.u32 [#allocation5], 4
      %s268 = int_to_ptr.vmem [resolvable:$true] %s267
      %270 = dma.vmem_to_hbm [thread:$0]  %s268, 64, %s1, [#allocation3]
    $region13: #{sinusoidal_embeddings_forward.1} parent=1 // pred_fallthru
      _
    // Predicated region
    $region14: #{sinusoidal_embeddings_forward.1} parent=1 // pred_check
      _
    $region15: #{sinusoidal_embeddings_forward.1} parent=1 // pred_check_branch
      %272 = sbr.rel (0) target = $region17
    $region16: #{sinusoidal_embeddings_forward.1} parent=1 // pred_region
      %273 = dma.done [#allocation3], 64
    $region17: #{sinusoidal_embeddings_forward.1} parent=1 // pred_fallthru
      _
    %274 = vsyncpa [#allocation3], 1
    %275 = vsyncpa [#allocation4], 1

// kernel: sinusoidal_embeddings_forward_table.1
$region0: #{sinusoidal_embeddings_forward_table.1}
  #allocation0 [shape = 'u32[]', space=smem, size = 0x4, offset = 0x4, fixed_abs, tag = 'smem constant byte address 0x4 - core index']
  #allocation1 [shape = 'u32[144,128]{1,0:T(1,128)}', space=vmem, size = 0x12000, scoped, tag = 'internal scratch']
  %s0 = inlined_call_operand.hbm [shape: s32[4], index: 0, kind: input, shape index: {}]
  %s1 = inlined_call_operand.hbm [shape: f32[64,128], index: 1, kind: input, shape index: {}]
  %s2 = inlined_call_operand.hbm [shape: f32[4,128], index: 2, kind: output, shape index: {}]
  %s3 = sld [smem:[#allocation0]]
  $region26: #{sinusoidal_embeddings_forward_table.1} parent=0
    _
  %s5 = ssub.s32 1, %s3
  %s6 = scalar_select 0, %s5, %s3
  $region1: #{sinusoidal_embeddings_forward_table.1} parent=0
    #allocation2 [shape = 'u8[512]{0}', space=smem, size = 0x200, scoped, tag = 'input window, operand 0, single buffered']
    #allocation3 [shape = 's32[1]{0}', space=sflag, size = 0x4, scoped, tag = 'scoped memory for sinusoidal_embeddings_forward_table.1']
    #allocation4 [shape = 's32[1]{0}', space=sflag, size = 0x4, scoped, tag = 'scoped memory for sinusoidal_embeddings_forward_table.1']
    #allocation5 [shape = 's32[1]{0}', space=sflag, size = 0x4, scoped, tag = 'scoped memory for sinusoidal_embeddings_forward_table.1']
    #allocation6 [shape = 'u8[32768]{0}', space=vmem, size = 0x8000, scoped, tag = 'input window, operand 1, single buffered']
    #allocation7 [shape = 'u8[2048]{0}', space=vmem, size = 0x800, scoped, tag = 'output window, operand 0, single buffered']
    %7 = vsyncpa [#allocation5], 0
    %8 = vsyncpa [#allocation3], 0
    %9 = vsyncpa [#allocation4], 0
    // Predicated region
    $region2: #{sinusoidal_embeddings_forward_table.1} parent=1 // pred_check
      _
    $region3: #{sinusoidal_embeddings_forward_table.1} parent=1 // pred_check_branch
      %11 = sbr.rel (0) target = $region5
    $region4: #{sinusoidal_embeddings_forward_table.1} parent=1 // pred_region
      %s13 = ssub.s32 16, 16
      %14 = vsyncadd [#allocation5], %s13
      %17 = dma.hbm_to_smem %s0, 16, [#allocation2], [#allocation5]
    $region5: #{sinusoidal_embeddings_forward_table.1} parent=1 // pred_fallthru
      _
    // Predicated region
    $region6: #{sinusoidal_embeddings_forward_table.1} parent=1 // pred_check
      _
    $region7: #{sinusoidal_embeddings_forward_table.1} parent=1 // pred_check_branch
      %19 = sbr.rel (0) target = $region9
    $region8: #{sinusoidal_embeddings_forward_table.1} parent=1 // pred_region
      %s21 = ssub.s32 1024, 1024
      %22 = vsyncadd [#allocation3], %s21
      %s23 = sshll.u32 [#allocation6], 4
      %s24 = int_to_ptr.vmem [resolvable:$true] %s23
      %29 = dma.hbm_to_vmem [thread:$0]  %s1, 1024, %s24, [#allocation3], 128, 128, 8
    $region9: #{sinusoidal_embeddings_forward_table.1} parent=1 // pred_fallthru
      _
    // Predicated region
    $region10: #{sinusoidal_embeddings_forward_table.1} parent=1 // pred_check
      _
    $region11: #{sinusoidal_embeddings_forward_table.1} parent=1 // pred_check_branch
      %31 = sbr.rel (0) target = $region13
    $region12: #{sinusoidal_embeddings_forward_table.1} parent=1 // pred_region
      %32 = dma.done [#allocation5], 16
    $region13: #{sinusoidal_embeddings_forward_table.1} parent=1 // pred_fallthru
      _
    // Predicated region
    $region14: #{sinusoidal_embeddings_forward_table.1} parent=1 // pred_check
      _
    $region15: #{sinusoidal_embeddings_forward_table.1} parent=1 // pred_check_branch
      %34 = sbr.rel (0) target = $region17
    $region16: #{sinusoidal_embeddings_forward_table.1} parent=1 // pred_region
      %35 = dma.done [#allocation3], 1024
    $region17: #{sinusoidal_embeddings_forward_table.1} parent=1 // pred_fallthru
      _
    %36 = sfence
    %s37 = sld [smem:[#allocation2]]
    %p38 = scmp.gt.s32.totalorder %s37, 0
    %s39 = scalar_select %p38, %s37, 0
    %p40 = scmp.lt.s32.totalorder %s39, 63
    %s41 = scalar_select %p40, %s39, 63
    %s42 = scalar_lea.vmem [#allocation6], %s41
    %v43 = vld [vmem:[%s42] sm:$0x1]
    %s44 = sld [smem:[#allocation2 + $0x1]]
    %p45 = scmp.gt.s32.totalorder %s44, 0
    %s46 = scalar_select %p45, %s44, 0
    %p47 = scmp.lt.s32.totalorder %s46, 63
    %s48 = scalar_select %p47, %s46, 63
    %s49 = scalar_lea.vmem [#allocation6], %s48
    %v50 = vld [vmem:[%s49] sm:$0x1]
    %s51 = sld [smem:[#allocation2 + $0x2]]
    %p52 = scmp.gt.s32.totalorder %s51, 0
    %s53 = scalar_select %p52, %s51, 0
    %p54 = scmp.lt.s32.totalorder %s53, 63
    %s55 = scalar_select %p54, %s53, 63
    %s56 = scalar_lea.vmem [#allocation6], %s55
    %v57 = vld [vmem:[%s56] sm:$0x1]
    %s58 = sld [smem:[#allocation2 + $0x3]]
    %p59 = scmp.gt.s32.totalorder %s58, 0
    %s60 = scalar_select %p59, %s58, 0
    %p61 = scmp.lt.s32.totalorder %s60, 63
    %s62 = scalar_select %p61, %s60, 63
    %s63 = scalar_lea.vmem [#allocation6], %s62
    %v64 = vld [vmem:[%s63] sm:$0x1]
    %v66 = vrot.slane %v50, 7
    %v69 = vrot.slane %v57, 6
    %v72 = vrot.slane %v64, 5
    %vm74 = vcmask 1040384
    %v75 = vsel %vm74, %v43, %v66
    %vm76 = vcmask 1041408
    %v77 = vsel %vm76, %v75, %v69
    %vm78 = vcmask 1042432
    %v79 = vsel %vm78, %v77, %v72
    %80 = vst [vmem:[#allocation7] sm:$0xf] %v79
    // Predicated region
    $region18: #{sinusoidal_embeddings_forward_table.1} parent=1 // pred_check
      _
    $region19: #{sinusoidal_embeddings_forward_table.1} parent=1 // pred_check_branch
      %82 = sbr.rel (0) target = $region21
    $region20: #{sinusoidal_embeddings_forward_table.1} parent=1 // pred_region
      %s84 = ssub.s32 64, 64
      %85 = vsyncadd [#allocation4], %s84
      %s87 = sshll.u32 [#allocation7], 4
      %s88 = int_to_ptr.vmem [resolvable:$true] %s87
      %90 = dma.vmem_to_hbm [thread:$0]  %s88, 64, %s2, [#allocation4]
    $region21: #{sinusoidal_embeddings_forward_table.1} parent=1 // pred_fallthru
      _
    // Predicated region
    $region22: #{sinusoidal_embeddings_forward_table.1} parent=1 // pred_check
      _
    $region23: #{sinusoidal_embeddings_forward_table.1} parent=1 // pred_check_branch
      %92 = sbr.rel (0) target = $region25
    $region24: #{sinusoidal_embeddings_forward_table.1} parent=1 // pred_region
      %93 = dma.done [#allocation4], 64
    $region25: #{sinusoidal_embeddings_forward_table.1} parent=1 // pred_fallthru
      _
    %94 = vsyncpa [#allocation3], 1
    %95 = vsyncpa [#allocation4], 1
    %96 = vsyncpa [#allocation5], 1

</llo_original>
